<compile_context>
chip_gen: v6e
topology: v6e:2x2x1
jax: 0.10.0
libtpu: 0.0.40
codegen_flags: <defaults>
</compile_context>

<pallas_src>
import jax
import jax.numpy as jnp
import numpy as np
from jax.experimental import pallas as pl
from jax.experimental.pallas import tpu as pltpu

_LANES = 128                              # vreg lane width; last block dim multiple of this
_TARGET_BLOCK_BYTES = 4 * 1024 * 1024     # ~4 MiB per block (per buffer) -> near HBM roofline
_VMEM_LIMIT_BYTES = 32 * 1024 * 1024      # 4 live blocks (in+out, double-buffered) = 16 MiB + headroom


# ---------------------------------------------------------------------------
# Pallas kernel: copy one (block_rows, 128) tile
# ---------------------------------------------------------------------------
def _identity_copy_kernel(x_ref, o_ref):
    o_ref[...] = x_ref[...]


def _identity_copy_impl(x):
    orig_shape = x.shape
    n = x.size
    if n == 0:
        return x
    dtype = x.dtype
    itemsize = jnp.dtype(dtype).itemsize
    packing = max(1, 4 // itemsize)       # sub-32-bit dtypes pack along sublanes
    min_rows = 8 * packing                # sublane tile granularity for this dtype

    # Lane-dense (rows, 128) slab.  For n % 128 == 0 (the common activation case) this is a
    # pure reshape: no pad, no slice, no extra HBM pass outside the kernel.
    rows = pl.cdiv(n, _LANES)
    padded_n = rows * _LANES
    needs_pad = padded_n != n             # ragged tail: pads at most 127 elements

    flat = x.reshape(-1)
    if needs_pad:
        flat = jnp.pad(flat, (0, padded_n - n))
    slab = flat.reshape(rows, _LANES)

    # Block sizing: ~4 MiB per block regardless of dtype (rows scale with 1/itemsize).
    max_block_rows = max(min_rows, _TARGET_BLOCK_BYTES // (_LANES * itemsize))
    if rows <= min_rows:
        block_rows = rows                 # block equals full row dim (allowed by (8,128) rule)
    else:
        block_rows = min(max_block_rows, rows)
        if block_rows >= rows:
            # Prefer >= 2 programs so the parallel axis can shard across v7x's two TensorCores.
            block_rows = pl.cdiv(rows, 2)
        block_rows = ((block_rows + min_rows - 1) // min_rows) * min_rows
        block_rows = min(block_rows, max_block_rows)

    grid = (pl.cdiv(rows, block_rows),)   # partial tail block handled by Pallas boundary masking

    out = pl.pallas_call(
        _identity_copy_kernel,
        out_shape=jax.ShapeDtypeStruct((rows, _LANES), dtype),
        grid=grid,
        in_specs=[pl.BlockSpec((block_rows, _LANES), lambda i: (i, 0))],
        out_specs=pl.BlockSpec((block_rows, _LANES), lambda i: (i, 0)),
        compiler_params=pltpu.CompilerParams(
            dimension_semantics=("parallel",),
            vmem_limit_bytes=_VMEM_LIMIT_BYTES,
        ),
    )(slab)

    out_flat = out.reshape(-1)
    if needs_pad:
        out_flat = out_flat[:n]
    return out_flat.reshape(orig_shape)


# Shapes are static under jit, so all tiling math above resolves at trace time.
identity_copy = jax.jit(_identity_copy_impl)


# ---------------------------------------------------------------------------
# Identity: JAX/Pallas port of the PyTorch module
# ---------------------------------------------------------------------------
class Identity:
    """An identity layer: forward(x) -> x.

    Default path returns x directly (zero HBM traffic, exact nn.Identity semantics).
    With materialize=True the output is produced by the tiled Pallas copy kernel
    (useful for benchmarking the memory-bound copy path).
    """

    def __init__(self, materialize=False):
        self._materialize = materialize

    def forward(self, x):
        if self._materialize:
            return identity_copy(x)
        return x

    __call__ = forward


# ---------------------------------------------------------------------------
# Deterministic setup + smoke test
# ---------------------------------------------------------------------------
if __name__ == "__main__":
    key = jax.random.PRNGKey(0)
    k1, k2, k3 = jax.random.split(key, 3)

    # 1) True identity path (returns x).
    layer = Identity()
    x = jax.random.normal(k1, (2, 4, 16, 16), jnp.float32)
    y = jax.block_until_ready(layer(x))
    assert y.shape == x.shape and y.dtype == x.dtype
    np.testing.assert_array_equal(np.asarray(y), np.asarray(x))

    # 2) Pallas copy-kernel path on the same activation shape (2048 elems -> 2 row blocks).
    layer_mat = Identity(materialize=True)
    y_mat = jax.block_until_ready(layer_mat(x))
    assert y_mat.shape == x.shape and y_mat.dtype == x.dtype
    np.testing.assert_array_equal(np.asarray(y_mat), np.asarray(x))

    # 3) Ragged-size test: exercises the minimal pad/slice path.
    x2 = jax.random.normal(k2, (3, 5, 7), jnp.float32)
    y2 = jax.block_until_ready(layer_mat(x2))
    assert y2.shape == x2.shape and y2.dtype == x2.dtype
    np.testing.assert_array_equal(np.asarray(y2), np.asarray(x2))

    # 4) Packed-dtype test (bf16): exercises the sublane-packing row granularity.
    x3 = jax.random.normal(k3, (2, 8, 32), jnp.float32).astype(jnp.bfloat16)
    y3 = jax.block_until_ready(layer_mat(x3))
    assert y3.shape == x3.shape and y3.dtype == x3.dtype
    np.testing.assert_array_equal(np.asarray(y3), np.asarray(x3))

    print("KERNEL_OK")
</pallas_src>

<mosaic_0001>
module attributes {stable_mosaic.version = 11 : i64} {
  func.func @_identity_copy_kernel(%arg0: i32, %arg1: memref<8x128xf32, #tpu.memory_space<vmem>>, %arg2: memref<8x128xf32, #tpu.memory_space<vmem>>) attributes {dimension_semantics = [#tpu.dimension_semantics<parallel>], iteration_bounds = array<i64: 2>, scalar_prefetch = 0 : i64, scratch_operands = 0 : i64, tpu.core_type = #tpu.core_type<tc>, window_params = [{transform_indices = @transform_0, window_bounds = array<i64: 8, 128>}, {transform_indices = @transform_1, window_bounds = array<i64: 8, 128>}]} {
    %c0 = arith.constant 0 : index
    %c0_0 = arith.constant 0 : index
    %0 = vector.load %arg1[%c0, %c0_0] : memref<8x128xf32, #tpu.memory_space<vmem>>, vector<8x128xf32>
    %c0_1 = arith.constant 0 : index
    %c0_2 = arith.constant 0 : index
    %1 = vector.load %arg2[%c0_1, %c0_2] : memref<8x128xf32, #tpu.memory_space<vmem>>, vector<8x128xf32>
    tpu.vector_store %arg2[%c0_1, %c0_2], %0 {strides = array<i32>} : memref<8x128xf32, #tpu.memory_space<vmem>>, vector<8x128xf32>,
    return
  }
  func.func @transform_0(%arg0: i32) -> (i32, i32) {
    %c0_i32 = arith.constant 0 : i32
    %c0_i32_0 = arith.constant 0 : i32
    return %arg0, %c0_i32 : i32, i32
  }
  func.func @transform_1(%arg0: i32) -> (i32, i32) {
    %c0_i32 = arith.constant 0 : i32
    %c0_i32_0 = arith.constant 0 : i32
    return %arg0, %c0_i32 : i32, i32
  }
}

</mosaic_0001>

<llo_original>
// kernel: _identity_copy_impl.1
$region0: #{_identity_copy_impl.1}
  #allocation0 [shape = 'u32[]', space=smem, size = 0x4, offset = 0x4, fixed_abs, tag = 'smem constant byte address 0x4 - core index']
  #allocation1 [shape = 'u32[144,128]{1,0:T(1,128)}', space=vmem, size = 0x12000, scoped, tag = 'internal scratch']
  %s0 = inlined_call_operand.vmem [shape: f32[16,128], index: 0, kind: input, shape index: {}]
  %s1 = inlined_call_operand.vmem [shape: f32[16,128], index: 1, kind: output, shape index: {}]
  %s2 = sld [smem:[#allocation0]]
  $region37: #{_identity_copy_impl.1} parent=0
    _
  %s4 = ssub.s32 1, %s2
  %s5 = scalar_select 0, %s4, %s2
  loop: start=0, step=1, limit=4
  $region2: #{_identity_copy_impl.1} parent=0 // loop_pre_header
    _
  $region3: #{_identity_copy_impl.1} parent=0 // loop_header
    %s7 = sphi 0, %s11
    %p8 = scmp.ge.s32.totalorder %s7, 4
    %s17 = sphi 0, %s19
    %s20 = sphi 0, %s17
    %s21 = sphi 0, %s20
    %s37 = sphi 0, %s21
    %s43 = sphi 0, %s45
    %s46 = sphi 0, %s43
    %s47 = sphi 0, %s46
    %s63 = sphi 0, %s47
  $region4: #{_identity_copy_impl.1} parent=0 // loop_header_branch
    %10 = sbr.rel (%p8) target = $region8
  $region5: #{_identity_copy_impl.1} parent=0 // loop_body
    %s12 = ssub.s32 %s7, 1
    %s13 = ssub.s32 %s7, 2
    %s14 = sadd.s32 %s7, 1
    %s15 = ssub.s32 %s7, %s14
    %p16 = scmp.eq.s32.totalorder %s15, 0
    %s18 = sadd.s32 %s17, 1
    %s19 = scalar_select %p16, %s17, %s18
    %p22 = pneg %p16
    %p23 = scmp.eq.s32.totalorder %s7, 1
    %p24 = por %p22, %p23
    %p25 = scmp.ne.s32.totalorder %s17, %s20
    %p26 = scmp.eq.s32.totalorder %s7, 0
    %p27 = por %p25, %p26
    %p28 = scmp.ne.s32.totalorder %s17, %s20
    %p29 = scmp.eq.s32.totalorder %s12, 1
    %p30 = por %p28, %p29
    %p31 = scmp.ne.s32.totalorder %s20, %s21
    %p32 = scmp.eq.s32.totalorder %s12, 0
    %p33 = por %p31, %p32
    %p34 = scmp.ne.s32.totalorder %s20, %s21
    %p35 = scmp.eq.s32.totalorder %s13, 1
    %p36 = por %p34, %p35
    %p38 = scmp.ne.s32.totalorder %s21, %s37
    %p39 = scmp.eq.s32.totalorder %s13, 0
    %p40 = por %p38, %p39
    %s41 = ssub.s32 %s7, %s14
    %p42 = scmp.eq.s32.totalorder %s41, 0
    %s44 = sadd.s32 %s43, 1
    %s45 = scalar_select %p42, %s43, %s44
    %p48 = pneg %p42
    %p49 = scmp.eq.s32.totalorder %s7, 1
    %p50 = por %p48, %p49
    %p51 = scmp.ne.s32.totalorder %s43, %s46
    %p52 = scmp.eq.s32.totalorder %s7, 0
    %p53 = por %p51, %p52
    %p54 = scmp.ne.s32.totalorder %s43, %s46
    %p55 = scmp.eq.s32.totalorder %s12, 1
    %p56 = por %p54, %p55
    %p57 = scmp.ne.s32.totalorder %s46, %s47
    %p58 = scmp.eq.s32.totalorder %s12, 0
    %p59 = por %p57, %p58
    %p60 = scmp.ne.s32.totalorder %s46, %s47
    %p61 = scmp.eq.s32.totalorder %s13, 1
    %p62 = por %p60, %p61
    %p64 = scmp.ne.s32.totalorder %s47, %s63
    %p65 = scmp.eq.s32.totalorder %s13, 0
    %p66 = por %p64, %p65
    %p67 = scmp.le.s32.totalorder 1, %s7
    %p68 = scmp.lt.s32.totalorder %s7, 3
    %p69 = pnand %p67, %p68
    %p70 = pneg %p69
    // Predicated region
    $region9: #{_identity_copy_impl.1} parent=5 // pred_check
      _
    $region10: #{_identity_copy_impl.1} parent=5 // pred_check_branch
      %72 = sbr.rel (%p69) target = $region12
    $region11: #{_identity_copy_impl.1} parent=5 // pred_region
      %s73 = ssub.s32 %s7, 1
    $region12: #{_identity_copy_impl.1} parent=5 // pred_fallthru
      _
    %p74 = scmp.lt.s32.totalorder %s7, 2
    // Predicated region
    $region13: #{_identity_copy_impl.1} parent=5 // pred_check
      %p75 = pneg %p74
    $region14: #{_identity_copy_impl.1} parent=5 // pred_check_branch
      %77 = sbr.rel (%p75) target = $region16
    $region15: #{_identity_copy_impl.1} parent=5 // pred_region
      // Predicated region
      $region17: #{_identity_copy_impl.1} parent=15 // pred_check
        %p78 = pneg %p27
      $region18: #{_identity_copy_impl.1} parent=15 // pred_check_branch
        %80 = sbr.rel (%p78) target = $region20
      $region19: #{_identity_copy_impl.1} parent=15 // pred_region
        %p81 = scmp.lt.s32.totalorder %s7, 1
        %s82 = scalar_select %p81, %s7, 1
        %s83 = smul.addr %s82, 8
        %s84 = scalar_lea.vmem %s0, %s83
      $region20: #{_identity_copy_impl.1} parent=15 // pred_fallthru
        _
    $region16: #{_identity_copy_impl.1} parent=5 // pred_fallthru
      _
    %p85 = scmp.le.s32.totalorder 1, %s7
    %p86 = scmp.lt.s32.totalorder %s7, 3
    %p87 = pnand %p85, %p86
    %p88 = pneg %p87
    // Predicated region
    $region21: #{_identity_copy_impl.1} parent=5 // pred_check
      _
    $region22: #{_identity_copy_impl.1} parent=5 // pred_check_branch
      %90 = sbr.rel (%p87) target = $region24
    $region23: #{_identity_copy_impl.1} parent=5 // pred_region
      %s91 = ssub.s32 %s7, 1
      %p92 = scmp.lt.s32.totalorder %s12, 1
      %s93 = scalar_select %p92, %s12, 1
      %s94 = smul.addr %s93, 8
      %s95 = scalar_lea.vmem %s0, %s94
      %p96 = pneg %p33
      %p97 = pneg %p30
      %p98 = pneg %p59
      %p99 = pneg %p56
      %p100 = scmp.lt.s32.totalorder %s12, 1
      %s101 = scalar_select %p100, %s12, 1
      %s102 = smul.addr %s101, 8
      %s103 = scalar_lea.vmem %s1, %s102
      %p104 = scmp.lt.s32.totalorder %s12, 1
      %s105 = scalar_select %p104, %s12, 1
      %s106 = smul.addr %s105, 8
      %s107 = scalar_lea.vmem %s0, %s106
      %p108 = scmp.lt.s32.totalorder %s12, 1
      %s109 = scalar_select %p108, %s12, 1
      %s110 = smul.addr %s109, 8
      %s111 = scalar_lea.vmem %s1, %s110
      %v112 = vld [vmem:[%s107] sm:$0xff]
      %113 = vst [vmem:[%s111] sm:$0xff] %v112
      %p114 = scmp.lt.s32.totalorder %s12, 1
      %s115 = scalar_select %p114, %s12, 1
      %s116 = smul.addr %s115, 8
      %s117 = scalar_lea.vmem %s1, %s116
      // Predicated region
      $region25: #{_identity_copy_impl.1} parent=23 // pred_check
        %p118 = pneg %p56
      $region26: #{_identity_copy_impl.1} parent=23 // pred_check_branch
        %120 = sbr.rel (%p118) target = $region28
      $region27: #{_identity_copy_impl.1} parent=23 // pred_region
        _
      $region28: #{_identity_copy_impl.1} parent=23 // pred_fallthru
        _
    $region24: #{_identity_copy_impl.1} parent=5 // pred_fallthru
      _
    %p121 = scmp.le.s32.totalorder 2, %s7
    // Predicated region
    $region29: #{_identity_copy_impl.1} parent=5 // pred_check
      %p122 = pneg %p121
    $region30: #{_identity_copy_impl.1} parent=5 // pred_check_branch
      %124 = sbr.rel (%p122) target = $region32
    $region31: #{_identity_copy_impl.1} parent=5 // pred_region
      %s125 = ssub.s32 %s7, 2
      // Predicated region
      $region33: #{_identity_copy_impl.1} parent=31 // pred_check
        %p126 = pneg %p62
      $region34: #{_identity_copy_impl.1} parent=31 // pred_check_branch
        %128 = sbr.rel (%p126) target = $region36
      $region35: #{_identity_copy_impl.1} parent=31 // pred_region
        %p129 = scmp.lt.s32.totalorder %s13, 1
        %s130 = scalar_select %p129, %s13, 1
        %s131 = smul.addr %s130, 8
        %s132 = scalar_lea.vmem %s1, %s131
      $region36: #{_identity_copy_impl.1} parent=31 // pred_fallthru
        _
    $region32: #{_identity_copy_impl.1} parent=5 // pred_fallthru
      _
  $region6: #{_identity_copy_impl.1} parent=0 // loop_footer
    %s11 = sadd.s32 1, %s7
  $region7: #{_identity_copy_impl.1} parent=0 // loop_footer_branch
    %6 = sbr.rel target = $region3
  $region8: #{_identity_copy_impl.1} parent=0 // loop_exit
    _

</llo_original>
